<compile_context>
chip_gen: v5e
topology: v5e:2x2
jax: 0.10.0
libtpu: 0.0.40
codegen_flags: <defaults>
</compile_context>

<pallas_src>
import functools

import jax
import jax.numpy as jnp
from jax import lax
from jax.experimental import pallas as pl
from jax.experimental.pallas import tpu as pltpu


def _conv_kernel(x_ref, w_ref, b_ref, o_ref):
    """One row-block of the lowered convolution.

    x_ref: (R_BLK, KH*Wp*Cin)   bf16 im2col'd input rows (VMEM)
    w_ref: (KH*Wp*Cin, Wo*Cout) bf16 lowered block-banded weight (VMEM)
    b_ref: (1, Wo*Cout)         f32 bias tiled per output column (VMEM)
    o_ref: (R_BLK, Wo*Cout)     lane-dense output slab (VMEM)
    """
    acc = jnp.dot(x_ref[...], w_ref[...], preferred_element_type=jnp.float32)
    acc = acc + b_ref[...].astype(jnp.float32)          # broadcast over rows
    o_ref[...] = acc.astype(o_ref.dtype)


def _lower_weight(w_hwio, Wp, Wo):
    """Block-banded lowered weight.

    w_hwio: (KH, KW, Cin, Cout)
    returns (KH, Wp*Cin, Wo*Cout) with
      Wmat[kh, w_in*Cin + ci, wo*Cout + co] =
          w_hwio[kh, w_in - wo, ci, co]   if 0 <= w_in - wo < KW else 0
    so a fused input row @ Wmat[kh] performs the kw- and Cin-reductions for
    every output column wo at once.
    """
    KH, KW, Cin, Cout = w_hwio.shape
    w_in = jnp.arange(Wp)
    wo = jnp.arange(Wo)
    kw = w_in[None, :] - wo[:, None]                     # (Wo, Wp)
    valid = (kw >= 0) & (kw < KW)
    kw_c = jnp.clip(kw, 0, KW - 1)
    w_g = w_hwio[:, kw_c, :, :]                          # (KH, Wo, Wp, Cin, Cout)
    w_g = jnp.where(valid[None, :, :, None, None], w_g, 0.0)
    w_g = jnp.transpose(w_g, (0, 2, 3, 1, 4))            # (KH, Wp, Cin, Wo, Cout)
    return w_g.reshape(KH, Wp * Cin, Wo * Cout)


def conv_layer_forward(x_nchw, weight_oihw, bias, *, padding):
    """y = conv2d(x, weight, bias, stride=1, padding=padding), NCHW in/out."""
    N, Cin, H, W = x_nchw.shape
    Cout, _, KH, KW = weight_oihw.shape
    p = padding
    Ho = H + 2 * p - KH + 1
    Wo = W + 2 * p - KW + 1
    Hp, Wp = H + 2 * p, W + 2 * p
    Kdim = KH * Wp * Cin
    Ndim = Wo * Cout
    R = N * Ho

    # ---- wrapper-side layout prep (one-time data movement) -----------------
    x_nhwc = jnp.transpose(x_nchw, (0, 2, 3, 1))
    x_pad = jnp.pad(x_nhwc, ((0, 0), (p, p), (p, p), (0, 0)))
    # H-direction im2col: x_taps[n, ho, kh, w, c] = x_pad[n, ho+kh, w, c]
    x_taps = jnp.stack([x_pad[:, kh:kh + Ho] for kh in range(KH)], axis=2)
    x2d = x_taps.reshape(R, Kdim).astype(jnp.bfloat16)

    w_hwio = jnp.transpose(weight_oihw, (2, 3, 1, 0))            # (KH,KW,Cin,Cout)
    w_mat = (_lower_weight(w_hwio, Wp, Wo)
             .reshape(Kdim, Ndim)
             .astype(jnp.bfloat16))
    b_tiled = jnp.tile(bias, Wo).reshape(1, Ndim).astype(jnp.float32)

    # ---- grid: batch folded into M; at most 2 steps (feeds both v7x TCs) ---
    if N % 2 == 0 and ((N // 2) * Ho) % 8 == 0:
        n_steps = 2
    else:
        n_steps = 1
    r_blk = R // n_steps

    out2d = pl.pallas_call(
        _conv_kernel,
        out_shape=jax.ShapeDtypeStruct((R, Ndim), x_nchw.dtype),
        grid_spec=pltpu.PrefetchScalarGridSpec(
            num_scalar_prefetch=0,
            grid=(n_steps,),
            in_specs=[
                pl.BlockSpec((r_blk, Kdim), lambda r: (r, 0)),
                pl.BlockSpec((Kdim, Ndim), lambda r: (0, 0)),
                pl.BlockSpec((1, Ndim), lambda r: (0, 0)),
            ],
            out_specs=pl.BlockSpec((r_blk, Ndim), lambda r: (r, 0)),
        ),
        compiler_params=pltpu.CompilerParams(
            dimension_semantics=("parallel",),
        ),
    )(x2d, w_mat, b_tiled)

    # (N*Ho, Wo*Cout) -> (N, Cout, Ho, Wo)
    out_nhwc = out2d.reshape(N, Ho, Wo, Cout)
    return jnp.transpose(out_nhwc, (0, 3, 1, 2))


if __name__ == "__main__":
    # Small shapes consistent with the module: ConvLayer(4, 8, 3, padding=1)
    # on a (2, 4, 16, 16) NCHW input.
    N, Cin, H, W = 2, 4, 16, 16
    Cout, K, pad = 8, 3, 1

    key = jax.random.PRNGKey(0)
    kx, kw, kb = jax.random.split(key, 3)
    x = jax.random.normal(kx, (N, Cin, H, W), dtype=jnp.float32)
    # nn.Conv2d-style uniform(-b, b), b = 1/sqrt(Cin*K*K).
    bound = 1.0 / (Cin * K * K) ** 0.5
    weight = jax.random.uniform(
        kw, (Cout, Cin, K, K), dtype=jnp.float32, minval=-bound, maxval=bound
    )
    bias = jax.random.uniform(
        kb, (Cout,), dtype=jnp.float32, minval=-bound, maxval=bound
    )

    out = conv_layer_forward(x, weight, bias, padding=pad)
    out = jax.block_until_ready(out)

    # Cross-check against XLA's native conv (same semantics as F.conv2d).
    # The kernel feeds bf16 operands to the MXU, so compare against a
    # reference that sees the same bf16-rounded operands (f32 accumulation).
    x_bf = x.astype(jnp.bfloat16).astype(jnp.float32)
    w_bf = weight.astype(jnp.bfloat16).astype(jnp.float32)
    ref = lax.conv_general_dilated(
        x_bf, w_bf, window_strides=(1, 1), padding=[(pad, pad), (pad, pad)],
        dimension_numbers=("NCHW", "OIHW", "NCHW"),
        preferred_element_type=jnp.float32,
    ) + bias.reshape(1, Cout, 1, 1)
    assert out.shape == ref.shape == (N, Cout, H, W)
    assert jnp.allclose(out, ref, rtol=1e-3, atol=1e-3)

    print("KERNEL_OK")
</pallas_src>

<mosaic_0001>
module attributes {stable_mosaic.version = 11 : i64} {
  func.func @_conv_kernel(%arg0: i32, %arg1: memref<16x216xbf16, #tpu.memory_space<vmem>>, %arg2: memref<216x128xbf16, #tpu.memory_space<vmem>>, %arg3: memref<1x128xf32, #tpu.memory_space<vmem>>, %arg4: memref<16x128xf32, #tpu.memory_space<vmem>>) attributes {dimension_semantics = [#tpu.dimension_semantics<parallel>], iteration_bounds = array<i64: 2>, scalar_prefetch = 0 : i64, scratch_operands = 0 : i64, tpu.core_type = #tpu.core_type<tc>, window_params = [{transform_indices = @transform_0, window_bounds = array<i64: 16, 216>}, {pipeline_mode = #tpu.pipeline_mode<synchronous>, transform_indices = @transform_1, window_bounds = array<i64: 216, 128>}, {pipeline_mode = #tpu.pipeline_mode<synchronous>, transform_indices = @transform_2, window_bounds = array<i64: 1, 128>}, {transform_indices = @transform_3, window_bounds = array<i64: 16, 128>}]} {
    %c0 = arith.constant 0 : index
    %c0_0 = arith.constant 0 : index
    %0 = vector.load %arg1[%c0, %c0_0] : memref<16x216xbf16, #tpu.memory_space<vmem>>, vector<16x216xbf16>
    %c0_1 = arith.constant 0 : index
    %c0_2 = arith.constant 0 : index
    %1 = vector.load %arg2[%c0_1, %c0_2] : memref<216x128xbf16, #tpu.memory_space<vmem>>, vector<216x128xbf16>
    %cst = arith.constant dense<0.000000e+00> : vector<16x128xf32>
    %2 = tpu.matmul %0, %1, %cst {dimension_numbers = #tpu.dot_dimension_numbers<[1], [0], [0], [1], [0, 0, 1, 1], [], []>} : vector<16x216xbf16>, vector<216x128xbf16>, vector<16x128xf32> -> vector<16x128xf32>
    %c0_3 = arith.constant 0 : index
    %c0_4 = arith.constant 0 : index
    %3 = vector.load %arg3[%c0_3, %c0_4] : memref<1x128xf32, #tpu.memory_space<vmem>>, vector<1x128xf32>
    %4 = vector.broadcast %3 : vector<1x128xf32> to vector<16x128xf32>
    %5 = arith.addf %2, %4 : vector<16x128xf32>
    %c0_5 = arith.constant 0 : index
    %c0_6 = arith.constant 0 : index
    %6 = vector.load %arg4[%c0_5, %c0_6] : memref<16x128xf32, #tpu.memory_space<vmem>>, vector<16x128xf32>
    tpu.vector_store %arg4[%c0_5, %c0_6], %5 {strides = array<i32>} : memref<16x128xf32, #tpu.memory_space<vmem>>, vector<16x128xf32>,
    return
  }
  func.func @transform_0(%arg0: i32) -> (i32, i32) {
    %c0_i32 = arith.constant 0 : i32
    %c0_i32_0 = arith.constant 0 : i32
    return %arg0, %c0_i32 : i32, i32
  }
  func.func @transform_1(%arg0: i32) -> (i32, i32) {
    %c0_i32 = arith.constant 0 : i32
    %c0_i32_0 = arith.constant 0 : i32
    %c0_i32_1 = arith.constant 0 : i32
    return %c0_i32, %c0_i32_0 : i32, i32
  }
  func.func @transform_2(%arg0: i32) -> (i32, i32) {
    %c0_i32 = arith.constant 0 : i32
    %c0_i32_0 = arith.constant 0 : i32
    %c0_i32_1 = arith.constant 0 : i32
    return %c0_i32, %c0_i32_0 : i32, i32
  }
  func.func @transform_3(%arg0: i32) -> (i32, i32) {
    %c0_i32 = arith.constant 0 : i32
    %c0_i32_0 = arith.constant 0 : i32
    return %arg0, %c0_i32 : i32, i32
  }
}

</mosaic_0001>

<llo_original>
// kernel: tpu_custom_call.1
$region0: #{tpu_custom_call.1}
  #allocation0 [shape = 'u32[]', space=smem, size = 0x4, offset = 0x4, fixed_abs, tag = 'smem constant byte address 0x4 - core index']
  #allocation1 [shape = 'u32[72,128]{1,0:T(1,128)}', space=vmem, size = 0x9000, scoped, tag = 'internal scratch']
  %s0 = inlined_call_operand.hbm [shape: bf16[32,216], index: 0, kind: input, shape index: {}]
  %s1 = inlined_call_operand.hbm [shape: bf16[216,128], index: 1, kind: input, shape index: {}]
  %s2 = inlined_call_operand.vmem [shape: f32[1,128], index: 2, kind: input, shape index: {}]
  %s3 = inlined_call_operand.hbm [shape: f32[32,128], index: 3, kind: output, shape index: {}]
  %s4 = sld [smem:[#allocation0]]
  $region53: #{tpu_custom_call.1} parent=0
    _
  %s6 = ssub.s32 1, %s4
  %s7 = scalar_select 0, %s6, %s4
  $region1: #{tpu_custom_call.1} parent=0
    #allocation2 [shape = 'u8[16384]{0}', space=vmem, size = 0x4000, scoped, tag = 'input window, operand 0']
    #allocation3 [shape = 's32[2]{0}', space=sflag, size = 0x8, scoped, tag = 'scoped memory for tpu_custom_call.1']
    #allocation4 [shape = 's32[2]{0}', space=sflag, size = 0x8, scoped, tag = 'scoped memory for tpu_custom_call.1']
    #allocation5 [shape = 'u8[55296]{0}', space=vmem, size = 0xd800, scoped, tag = 'input window, operand 1, single buffered']
    #allocation6 [shape = 's32[1]{0}', space=sflag, size = 0x4, scoped, tag = 'scoped memory for tpu_custom_call.1']
    #allocation7 [shape = 'u8[16384]{0}', space=vmem, size = 0x4000, scoped, tag = 'output window, operand 0']
    %8 = vsyncpa [#allocation3], 0
    %s9 = scalar_lea.sflag [#allocation3], 1
    %10 = vsyncpa %s9, 0
    %11 = vsyncpa [#allocation6], 0
    %12 = vsyncpa [#allocation4], 0
    %s13 = scalar_lea.sflag [#allocation4], 1
    %14 = vsyncpa %s13, 0
    loop: start=0, step=1, limit=4
    $region2: #{tpu_custom_call.1} parent=1 // loop_pre_header
      _
    $region3: #{tpu_custom_call.1} parent=1 // loop_header
      %s16 = sphi 0, %s20
      %p17 = scmp.ge.s32.totalorder %s16, 4
      %s26 = sphi 0, %s28
      %s29 = sphi 0, %s26
      %s30 = sphi 0, %s29
      %s46 = sphi 0, %s30
      %s50 = sphi 0, %s50
      %s52 = sphi 0, %s50
      %s53 = sphi 0, %s52
      %s67 = sphi 0, %s53
      %s71 = sphi 0, %s71
      %s73 = sphi 0, %s71
      %s74 = sphi 0, %s73
      %s88 = sphi 0, %s74
      %s94 = sphi 0, %s96
      %s97 = sphi 0, %s94
      %s98 = sphi 0, %s97
      %s114 = sphi 0, %s98
    $region4: #{tpu_custom_call.1} parent=1 // loop_header_branch
      %19 = sbr.rel (%p17) target = $region8
    $region5: #{tpu_custom_call.1} parent=1 // loop_body
      %s21 = ssub.s32 %s16, 1
      %s22 = ssub.s32 %s16, 2
      %s23 = sadd.s32 %s16, 1
      %s24 = ssub.s32 %s16, %s23
      %p25 = scmp.eq.s32.totalorder %s24, 0
      %s27 = sadd.s32 %s26, 1
      %s28 = scalar_select %p25, %s26, %s27
      %p31 = pneg %p25
      %p32 = scmp.eq.s32.totalorder %s16, 1
      %p33 = por %p31, %p32
      %p34 = scmp.ne.s32.totalorder %s26, %s29
      %p35 = scmp.eq.s32.totalorder %s16, 0
      %p36 = por %p34, %p35
      %p37 = scmp.ne.s32.totalorder %s26, %s29
      %p38 = scmp.eq.s32.totalorder %s21, 1
      %p39 = por %p37, %p38
      %p40 = scmp.ne.s32.totalorder %s29, %s30
      %p41 = scmp.eq.s32.totalorder %s21, 0
      %p42 = por %p40, %p41
      %p43 = scmp.ne.s32.totalorder %s29, %s30
      %p44 = scmp.eq.s32.totalorder %s22, 1
      %p45 = por %p43, %p44
      %p47 = scmp.ne.s32.totalorder %s30, %s46
      %p48 = scmp.eq.s32.totalorder %s22, 0
      %p49 = por %p47, %p48
      %s51 = sadd.s32 %s50, 1
      %p54 = scmp.eq.s32.totalorder %s16, 1
      %p55 = scmp.ne.s32.totalorder %s50, %s52
      %p56 = scmp.eq.s32.totalorder %s16, 0
      %p57 = por %p55, %p56
      %p58 = scmp.ne.s32.totalorder %s50, %s52
      %p59 = scmp.eq.s32.totalorder %s21, 1
      %p60 = por %p58, %p59
      %p61 = scmp.ne.s32.totalorder %s52, %s53
      %p62 = scmp.eq.s32.totalorder %s21, 0
      %p63 = por %p61, %p62
      %p64 = scmp.ne.s32.totalorder %s52, %s53
      %p65 = scmp.eq.s32.totalorder %s22, 1
      %p66 = por %p64, %p65
      %p68 = scmp.ne.s32.totalorder %s53, %s67
      %p69 = scmp.eq.s32.totalorder %s22, 0
      %p70 = por %p68, %p69
      %s72 = sadd.s32 %s71, 1
      %p75 = scmp.eq.s32.totalorder %s16, 1
      %p76 = scmp.ne.s32.totalorder %s71, %s73
      %p77 = scmp.eq.s32.totalorder %s16, 0
      %p78 = por %p76, %p77
      %p79 = scmp.ne.s32.totalorder %s71, %s73
      %p80 = scmp.eq.s32.totalorder %s21, 1
      %p81 = por %p79, %p80
      %p82 = scmp.ne.s32.totalorder %s73, %s74
      %p83 = scmp.eq.s32.totalorder %s21, 0
      %p84 = por %p82, %p83
      %p85 = scmp.ne.s32.totalorder %s73, %s74
      %p86 = scmp.eq.s32.totalorder %s22, 1
      %p87 = por %p85, %p86
      %p89 = scmp.ne.s32.totalorder %s74, %s88
      %p90 = scmp.eq.s32.totalorder %s22, 0
      %p91 = por %p89, %p90
      %s92 = ssub.s32 %s16, %s23
      %p93 = scmp.eq.s32.totalorder %s92, 0
      %s95 = sadd.s32 %s94, 1
      %s96 = scalar_select %p93, %s94, %s95
      %p99 = pneg %p93
      %p100 = scmp.eq.s32.totalorder %s16, 1
      %p101 = por %p99, %p100
      %p102 = scmp.ne.s32.totalorder %s94, %s97
      %p103 = scmp.eq.s32.totalorder %s16, 0
      %p104 = por %p102, %p103
      %p105 = scmp.ne.s32.totalorder %s94, %s97
      %p106 = scmp.eq.s32.totalorder %s21, 1
      %p107 = por %p105, %p106
      %p108 = scmp.ne.s32.totalorder %s97, %s98
      %p109 = scmp.eq.s32.totalorder %s21, 0
      %p110 = por %p108, %p109
      %p111 = scmp.ne.s32.totalorder %s97, %s98
      %p112 = scmp.eq.s32.totalorder %s22, 1
      %p113 = por %p111, %p112
      %p115 = scmp.ne.s32.totalorder %s98, %s114
      %p116 = scmp.eq.s32.totalorder %s22, 0
      %p117 = por %p115, %p116
      %p118 = scmp.le.s32.totalorder 1, %s16
      %p119 = scmp.lt.s32.totalorder %s16, 3
      %p120 = pnand %p118, %p119
      %p121 = pneg %p120
      // Predicated region
      $region9: #{tpu_custom_call.1} parent=5 // pred_check
        _
      $region10: #{tpu_custom_call.1} parent=5 // pred_check_branch
        %123 = sbr.rel (%p120) target = $region12
      $region11: #{tpu_custom_call.1} parent=5 // pred_region
        %s124 = ssub.s32 %s16, 1
        // Predicated region
        $region13: #{tpu_custom_call.1} parent=11 // pred_check
          %p125 = pneg %p63
        $region14: #{tpu_custom_call.1} parent=11 // pred_check_branch
          %127 = sbr.rel (%p125) target = $region16
        $region15: #{tpu_custom_call.1} parent=11 // pred_region
          %129 = vsyncadd [#allocation6], 0
          %s130 = sshll.u32 %s1, 4
          %s131 = int_to_ptr.hbm [resolvable:$true] %s130
          %s132 = sshll.u32 [#allocation5], 4
          %s133 = int_to_ptr.vmem [resolvable:$true] %s132
          %138 = dma.hbm_to_vmem [thread:$0]  %s131, 1728, %s133, [#allocation6], 64, 64, 4
        $region16: #{tpu_custom_call.1} parent=11 // pred_fallthru
          _
        // Predicated region
        $region17: #{tpu_custom_call.1} parent=11 // pred_check
          %p139 = pneg %p84
        $region18: #{tpu_custom_call.1} parent=11 // pred_check_branch
          %141 = sbr.rel (%p139) target = $region20
        $region19: #{tpu_custom_call.1} parent=11 // pred_region
          _
        $region20: #{tpu_custom_call.1} parent=11 // pred_fallthru
          _
      $region12: #{tpu_custom_call.1} parent=5 // pred_fallthru
        _
      %p142 = scmp.lt.s32.totalorder %s16, 2
      // Predicated region
      $region21: #{tpu_custom_call.1} parent=5 // pred_check
        %p143 = pneg %p142
      $region22: #{tpu_custom_call.1} parent=5 // pred_check_branch
        %145 = sbr.rel (%p143) target = $region24
      $region23: #{tpu_custom_call.1} parent=5 // pred_region
        // Predicated region
        $region25: #{tpu_custom_call.1} parent=23 // pred_check
          %p146 = pneg %p36
        $region26: #{tpu_custom_call.1} parent=23 // pred_check_branch
          %148 = sbr.rel (%p146) target = $region28
        $region27: #{tpu_custom_call.1} parent=23 // pred_region
          %s149 = sand.u32 %s26, 1
          %s150 = scalar_lea.sflag [#allocation3], %s149
          %s151 = sand.u32 %s26, 1
          %s152 = smul.addr %s151, 16
          %s153 = scalar_lea.vmem [#allocation2], %s152
          %s154 = smul.u32 2, %s16
          %156 = vsyncadd %s150, 0
          %s157 = smul.addr %s154, 2
          %s158 = smul.addr %s157, 4
          %s159 = scalar_lea.hbm %s0, %s158
          %s160 = sshll.u32 %s159, 4
          %s161 = int_to_ptr.hbm [resolvable:$true] %s160
          %s162 = sshll.u32 %s153, 4
          %s163 = int_to_ptr.vmem [resolvable:$true] %s162
          %168 = dma.hbm_to_vmem [thread:$0]  %s161, 256, %s163, %s150, 128, 128, 8
        $region28: #{tpu_custom_call.1} parent=23 // pred_fallthru
          _
      $region24: #{tpu_custom_call.1} parent=5 // pred_fallthru
        _
      %p169 = scmp.le.s32.totalorder 1, %s16
      %p170 = scmp.lt.s32.totalorder %s16, 3
      %p171 = pnand %p169, %p170
      %p172 = pneg %p171
      // Predicated region
      $region29: #{tpu_custom_call.1} parent=5 // pred_check
        _
      $region30: #{tpu_custom_call.1} parent=5 // pred_check_branch
        %174 = sbr.rel (%p171) target = $region32
      $region31: #{tpu_custom_call.1} parent=5 // pred_region
        %s175 = ssub.s32 %s16, 1
        %s176 = sand.u32 %s29, 1
        %s177 = scalar_lea.sflag [#allocation3], %s176
        %s178 = sand.u32 %s29, 1
        %s179 = smul.addr %s178, 16
        %s180 = scalar_lea.vmem [#allocation2], %s179
        // Predicated region
        $region33: #{tpu_custom_call.1} parent=31 // pred_check
          %p181 = pneg %p42
        $region34: #{tpu_custom_call.1} parent=31 // pred_check_branch
          %183 = sbr.rel (%p181) target = $region36
        $region35: #{tpu_custom_call.1} parent=31 // pred_region
          %185 = dma.done %s177, 256
        $region36: #{tpu_custom_call.1} parent=31 // pred_fallthru
          _
        // Predicated region
        $region37: #{tpu_custom_call.1} parent=31 // pred_check
          %p186 = pneg %p63
        $region38: #{tpu_custom_call.1} parent=31 // pred_check_branch
          %188 = sbr.rel (%p186) target = $region40
        $region39: #{tpu_custom_call.1} parent=31 // pred_region
          %190 = dma.done [#allocation6], 1728
        $region40: #{tpu_custom_call.1} parent=31 // pred_fallthru
          _
        %s191 = sand.u32 %s29, 1
        %s192 = scalar_lea.sflag [#allocation3], %s191
        %s193 = sand.u32 %s29, 1
        %s194 = smul.addr %s193, 16
        %s195 = scalar_lea.vmem [#allocation2], %s194
        %p196 = pneg %p42
        %p197 = pneg %p39
        %p198 = pneg %p63
        %p199 = pneg %p60
        %p200 = pneg %p84
        %p201 = pneg %p81
        %p202 = pneg %p110
        %p203 = pneg %p107
        %s204 = sand.u32 %s97, 1
        %s205 = scalar_lea.sflag [#allocation4], %s204
        %s206 = sand.u32 %s97, 1
        %s207 = smul.addr %s206, 16
        %s208 = scalar_lea.vmem [#allocation7], %s207
        %s209 = smul.u32 2, %s21
        %s210 = smul.u32 2, %s21
        %v212 = vld [vmem:[%s180] sm:$0xff]
        %v213 = vld [vmem:[%s180 + $0x8] sm:$0xff]
        %v214 = vld [vmem:[#allocation5] sm:$0xf]
        %v215 = vld [vmem:[#allocation5 + $0x4] sm:$0xf]
        %v216 = vld [vmem:[#allocation5 + $0x8] sm:$0xf]
        %v217 = vld [vmem:[#allocation5 + $0xc] sm:$0xf]
        %v218 = vld [vmem:[#allocation5 + $0x10] sm:$0xf]
        %v219 = vld [vmem:[#allocation5 + $0x14] sm:$0xf]
        %v220 = vld [vmem:[#allocation5 + $0x18] sm:$0xf]
        %v221 = vld [vmem:[#allocation5 + $0x1c] sm:$0xf]
        %v222 = vld [vmem:[#allocation5 + $0x20] sm:$0xf]
        %v223 = vld [vmem:[#allocation5 + $0x24] sm:$0xf]
        %v224 = vld [vmem:[#allocation5 + $0x28] sm:$0xf]
        %v225 = vld [vmem:[#allocation5 + $0x2c] sm:$0xf]
        %v226 = vld [vmem:[#allocation5 + $0x30] sm:$0xf]
        %v227 = vld [vmem:[#allocation5 + $0x34] sm:$0xf]
        %v228 = vld [vmem:[#allocation5 + $0x38] sm:$0xf]
        %v229 = vld [vmem:[#allocation5 + $0x3c] sm:$0xf]
        %v230 = vld [vmem:[#allocation5 + $0x40] sm:$0xf]
        %v231 = vld [vmem:[#allocation5 + $0x44] sm:$0xf]
        %v232 = vld [vmem:[#allocation5 + $0x48] sm:$0xf]
        %v233 = vld [vmem:[#allocation5 + $0x4c] sm:$0xf]
        %v234 = vld [vmem:[#allocation5 + $0x50] sm:$0xf]
        %v235 = vld [vmem:[#allocation5 + $0x54] sm:$0xf]
        %v236 = vld [vmem:[#allocation5 + $0x58] sm:$0xf]
        %v237 = vld [vmem:[#allocation5 + $0x5c] sm:$0xf]
        %v238 = vld [vmem:[#allocation5 + $0x60] sm:$0xf]
        %v239 = vld [vmem:[#allocation5 + $0x64] sm:$0xf]
        %v240 = vld [vmem:[#allocation5 + $0x68] sm:$0xf]
        %v241 = vld [vmem:[%s2] sm:$0x1]
        %v243 = vperm.slane %v241, 0
        %v247 = vunpack.c.l.b16 %v212
        %v248 = vunpack.c.h.b16 %v212
        %v249 = vunpack.c.l.b16 %v213
        %v250 = vunpack.c.h.b16 %v213
        %v251 = vpack.c.b16 %v249, %v247
        %v252 = vpack.c.b16 %v250, %v248
        %v281 = vunpack.c.l.b16 %v214
        %v282 = vunpack.c.l.b16 %v215
        %v283 = vunpack.c.l.b16 %v216
        %v284 = vunpack.c.l.b16 %v217
        %v285 = vunpack.c.l.b16 %v218
        %v286 = vunpack.c.l.b16 %v219
        %v287 = vunpack.c.l.b16 %v220
        %v288 = vunpack.c.l.b16 %v221
        %v289 = vunpack.c.l.b16 %v222
        %v290 = vunpack.c.l.b16 %v223
        %v291 = vunpack.c.l.b16 %v224
        %v292 = vunpack.c.l.b16 %v225
        %v293 = vunpack.c.l.b16 %v226
        %v294 = vunpack.c.l.b16 %v227
        %v295 = vunpack.c.l.b16 %v228
        %v296 = vunpack.c.l.b16 %v229
        %v297 = vunpack.c.l.b16 %v230
        %v298 = vunpack.c.l.b16 %v231
        %v299 = vunpack.c.l.b16 %v232
        %v300 = vunpack.c.l.b16 %v233
        %v301 = vunpack.c.l.b16 %v234
        %v302 = vunpack.c.l.b16 %v235
        %v303 = vunpack.c.l.b16 %v236
        %v304 = vunpack.c.l.b16 %v237
        %v305 = vunpack.c.l.b16 %v238
        %v306 = vunpack.c.l.b16 %v239
        %v307 = vunpack.c.l.b16 %v240
        %v308 = vpack.c.b16 %v282, %v281
        %v309 = vpack.c.b16 %v284, %v283
        %v310 = vpack.c.b16 %v286, %v285
        %v311 = vpack.c.b16 %v288, %v287
        %v312 = vpack.c.b16 %v290, %v289
        %v313 = vpack.c.b16 %v292, %v291
        %v314 = vpack.c.b16 %v294, %v293
        %v315 = vpack.c.b16 %v296, %v295
        %v316 = vpack.c.b16 %v298, %v297
        %v317 = vpack.c.b16 %v300, %v299
        %v318 = vpack.c.b16 %v302, %v301
        %v319 = vpack.c.b16 %v304, %v303
        %v320 = vpack.c.b16 %v306, %v305
        %v321 = vpack.c.b16 %v307, %v307
        %vm335 = vcmask 719872
        %v337 = vsel %vm335, %v252, 0
        %vm339 = vcmask 1043456
        %v341 = vsel %vm339, %v321, 0
        %343 = vmatpush.bf16.msra.mxu0 %v315
        %344 = vmatpush.bf16.msra.mxu0 %v314
        %345 = vmatpush.bf16.msra.mxu0 %v313
        %346 = vmatpush.bf16.msra.mxu0 %v312
        %347 = vmatpush.bf16.msra.mxu0 %v311
        %348 = vmatpush.bf16.msra.mxu0 %v310
        %349 = vmatpush.bf16.msra.mxu0 %v309
        %350 = vmatpush.bf16.msra.mxu0 %v308
        %351 = vmatmul.bf16.gmra.mxu0 %v251
        %v352 = vpop.f32.mrf.mxu0
        %v353 = vadd.f32 %v243, %v352
        %v354 = vpop.f32.mrf.mxu0
        %v355 = vadd.f32 %v243, %v354
        %356 = vdwg.mxu0
        %357 = vmatpush.bf16.msra.mxu0 0
        %358 = vmatpush.bf16.msra.mxu0 0
        %359 = vmatpush.bf16.msra.mxu0 %v341
        %360 = vmatpush.bf16.msra.mxu0 %v320
        %361 = vmatpush.bf16.msra.mxu0 %v319
        %362 = vmatpush.bf16.msra.mxu0 %v318
        %363 = vmatpush.bf16.msra.mxu0 %v317
        %364 = vmatpush.bf16.msra.mxu0 %v316
        %365 = vmatmul.bf16.gmra.mxu0 %v337
        %v366 = vpop.f32.mrf.mxu0
        %v367 = vadd.f32 %v353, %v366
        %v368 = vpop.f32.mrf.mxu0
        %v369 = vadd.f32 %v355, %v368
        %370 = vdwg.mxu0
        %371 = vst [vmem:[%s208] sm:$0xff] %v367
        %372 = vst [vmem:[%s208 + $0x8] sm:$0xff] %v369
        %s373 = sand.u32 %s97, 1
        %s374 = scalar_lea.sflag [#allocation4], %s373
        %s375 = sand.u32 %s97, 1
        %s376 = smul.addr %s375, 16
        %s377 = scalar_lea.vmem [#allocation7], %s376
        // Predicated region
        $region41: #{tpu_custom_call.1} parent=31 // pred_check
          %p378 = pneg %p107
        $region42: #{tpu_custom_call.1} parent=31 // pred_check_branch
          %380 = sbr.rel (%p378) target = $region44
        $region43: #{tpu_custom_call.1} parent=31 // pred_region
          %s381 = smul.u32 2, %s21
          %383 = vsyncadd %s374, 0
          %s384 = smul.addr %s381, 8
          %s385 = scalar_lea.hbm %s3, %s384
          %s386 = sshll.u32 %s377, 4
          %s387 = int_to_ptr.vmem [resolvable:$true] %s386
          %s388 = sshll.u32 %s385, 4
          %s389 = int_to_ptr.hbm [resolvable:$true] %s388
          %394 = dma.vmem_to_hbm [thread:$0]  %s387, 256, %s389, %s374, 128, 128, 8
        $region44: #{tpu_custom_call.1} parent=31 // pred_fallthru
          _
      $region32: #{tpu_custom_call.1} parent=5 // pred_fallthru
        _
      %p395 = scmp.le.s32.totalorder 2, %s16
      // Predicated region
      $region45: #{tpu_custom_call.1} parent=5 // pred_check
        %p396 = pneg %p395
      $region46: #{tpu_custom_call.1} parent=5 // pred_check_branch
        %398 = sbr.rel (%p396) target = $region48
      $region47: #{tpu_custom_call.1} parent=5 // pred_region
        %s399 = ssub.s32 %s16, 2
        // Predicated region
        $region49: #{tpu_custom_call.1} parent=47 // pred_check
          %p400 = pneg %p113
        $region50: #{tpu_custom_call.1} parent=47 // pred_check_branch
          %402 = sbr.rel (%p400) target = $region52
        $region51: #{tpu_custom_call.1} parent=47 // pred_region
          %s403 = sand.u32 %s98, 1
          %s404 = scalar_lea.sflag [#allocation4], %s403
          %s405 = sand.u32 %s98, 1
          %s406 = smul.addr %s405, 16
          %s407 = scalar_lea.vmem [#allocation7], %s406
          %409 = dma.done %s404, 256
        $region52: #{tpu_custom_call.1} parent=47 // pred_fallthru
          _
      $region48: #{tpu_custom_call.1} parent=5 // pred_fallthru
        _
    $region6: #{tpu_custom_call.1} parent=1 // loop_footer
      %s20 = sadd.s32 1, %s16
    $region7: #{tpu_custom_call.1} parent=1 // loop_footer_branch
      %15 = sbr.rel target = $region3
    $region8: #{tpu_custom_call.1} parent=1 // loop_exit
      _
    %410 = vsyncpa [#allocation3], 1
    %s411 = scalar_lea.sflag [#allocation3], 1
    %412 = vsyncpa %s411, 1
    %413 = vsyncpa [#allocation6], 1
    %414 = vsyncpa [#allocation4], 1
    %s415 = scalar_lea.sflag [#allocation4], 1
    %416 = vsyncpa %s415, 1

</llo_original>
